<compile_context>
chip_gen: v5e
topology: v5e:2x2
jax: 0.10.0
libtpu: 0.0.40
codegen_flags: <defaults>
</compile_context>

<pallas_src>
import functools

import jax
import jax.numpy as jnp
from jax.experimental import pallas as pl
from jax.experimental.pallas import tpu as pltpu

_LANES = 512              # lane-dense last dim (multiple of 128)
_DEFAULT_TILE_ROWS = 256  # 256*512*4 B = 512 KiB per f32 input block


def _round_up(x: int, m: int) -> int:
    return ((x + m - 1) // m) * m


def _l2_kernel_masked(pred_ref, label_ref, mask_ref, out_ref, acc_ref, *, inv_n):
    @pl.when(pl.program_id(0) == 0)
    def _init():
        acc_ref[...] = jnp.zeros_like(acc_ref)

    d = pred_ref[...].astype(jnp.float32) - label_ref[...].astype(jnp.float32)
    acc_ref[...] += d * d * mask_ref[...].astype(jnp.float32)

    @pl.when(pl.program_id(0) == pl.num_programs(0) - 1)
    def _finalize():
        out_ref[0, 0] = jnp.sum(acc_ref[...]) * inv_n


def _l2_kernel_nomask(pred_ref, label_ref, out_ref, acc_ref, *, inv_n):
    @pl.when(pl.program_id(0) == 0)
    def _init():
        acc_ref[...] = jnp.zeros_like(acc_ref)

    d = pred_ref[...].astype(jnp.float32) - label_ref[...].astype(jnp.float32)
    acc_ref[...] += d * d

    @pl.when(pl.program_id(0) == pl.num_programs(0) - 1)
    def _finalize():
        out_ref[0, 0] = jnp.sum(acc_ref[...]) * inv_n


def l2_loss(pred, label, mask=None, *, tile_rows=_DEFAULT_TILE_ROWS):
    """pred: [N, K, 2], label: [N, K, 2], mask: [N, K] or None -> scalar f32."""
    n, k, c = pred.shape
    assert label.shape == (n, k, c)
    total = n * k * c

    # Lane-dense flattening: rows of 512 lanes, rows a multiple of the tile.
    rows = _round_up(max(pl.cdiv(total, _LANES), 1), 8)
    tm = min(_round_up(tile_rows, 8), rows)
    rows = _round_up(rows, tm)
    grid = rows // tm
    padded_total = rows * _LANES

    def as_stream(x):
        flat = jnp.ravel(x)
        pad = padded_total - total
        if pad:
            flat = jnp.pad(flat, (0, pad))          # zero padding -> contributes 0
        return flat.reshape(rows, _LANES)

    inputs = [as_stream(pred), as_stream(label)]     # keep source dtype, cast in-kernel
    if mask is not None:
        mask_full = jnp.broadcast_to(mask[:, :, None], (n, k, c))
        inputs.append(as_stream(mask_full))
        kernel = functools.partial(_l2_kernel_masked, inv_n=1.0 / n)
    else:
        kernel = functools.partial(_l2_kernel_nomask, inv_n=1.0 / n)

    block = pl.BlockSpec((tm, _LANES), lambda i: (i, 0))

    out = pl.pallas_call(
        kernel,
        out_shape=jax.ShapeDtypeStruct((1, 1), jnp.float32),
        grid=(grid,),
        in_specs=[block] * len(inputs),
        out_specs=pl.BlockSpec(memory_space=pltpu.MemorySpace.SMEM),
        scratch_shapes=[pltpu.VMEM((tm, _LANES), jnp.float32)],
        compiler_params=pltpu.CompilerParams(
            dimension_semantics=("arbitrary",)),  # reduction axis (accumulator resident)
    )(*inputs)
    return out[0, 0]


def _reference(pred, label, mask=None):
    losses = (pred - label) ** 2
    if mask is not None:
        losses = losses * mask[:, :, None]
    return jnp.mean(jnp.sum(losses, axis=(1, 2)), axis=0)


if __name__ == "__main__":
    key = jax.random.PRNGKey(0)
    k_pred, k_label, k_mask = jax.random.split(key, 3)

    # shapes implied by the module: pred/label [N, K, 2], mask [N, K]
    N, K = 2, 8
    pred = jax.random.normal(k_pred, (N, K, 2), dtype=jnp.float32)
    label = jax.random.normal(k_label, (N, K, 2), dtype=jnp.float32)
    mask = (jax.random.uniform(k_mask, (N, K)) > 0.3).astype(jnp.float32)

    # masked case
    out_masked = jax.block_until_ready(l2_loss(pred, label, mask))
    ref_masked = _reference(pred, label, mask)
    assert jnp.allclose(out_masked, ref_masked, rtol=1e-5, atol=1e-5)

    # unmasked case (mask=None) -> two-input kernel, no ones stream
    out_plain = jax.block_until_ready(l2_loss(pred, label, None))
    ref_plain = _reference(pred, label, None)
    assert jnp.allclose(out_plain, ref_plain, rtol=1e-5, atol=1e-5)

    # multi-tile path (grid > 1) with a small tile to exercise pl.when
    # init / accumulate / finalize across grid steps.
    kp2, kl2, km2 = jax.random.split(jax.random.PRNGKey(1), 3)
    N2, K2 = 128, 24
    pred2 = jax.random.normal(kp2, (N2, K2, 2), dtype=jnp.float32)
    label2 = jax.random.normal(kl2, (N2, K2, 2), dtype=jnp.float32)
    mask2 = (jax.random.uniform(km2, (N2, K2)) > 0.5).astype(jnp.float32)
    out2 = jax.block_until_ready(l2_loss(pred2, label2, mask2, tile_rows=8))
    ref2 = _reference(pred2, label2, mask2)
    assert jnp.allclose(out2, ref2, rtol=1e-4, atol=1e-4)

    print("KERNEL_OK")
</pallas_src>

<mosaic_0001>
module attributes {stable_mosaic.version = 11 : i64} {
  func.func @_l2_kernel_masked(%arg0: i32, %arg1: memref<8x512xf32, #tpu.memory_space<vmem>>, %arg2: memref<8x512xf32, #tpu.memory_space<vmem>>, %arg3: memref<8x512xf32, #tpu.memory_space<vmem>>, %arg4: memref<1x1xf32, #tpu.memory_space<smem>>, %arg5: memref<8x512xf32, #tpu.memory_space<vmem>>) attributes {dimension_semantics = [#tpu.dimension_semantics<arbitrary>], iteration_bounds = array<i64: 1>, scalar_prefetch = 0 : i64, scratch_operands = 1 : i64, tpu.core_type = #tpu.core_type<tc>, window_params = [{transform_indices = @transform_0, window_bounds = array<i64: 8, 512>}, {transform_indices = @transform_1, window_bounds = array<i64: 8, 512>}, {transform_indices = @transform_2, window_bounds = array<i64: 8, 512>}, {transform_indices = @transform_3, window_bounds = array<i64: 1, 1>}]} {
    %c0_i32 = arith.constant 0 : i32
    %0 = arith.cmpi eq, %arg0, %c0_i32 : i32
    %1 = arith.extui %0 : i1 to i32
    %c0_i32_0 = arith.constant 0 : i32
    %2 = arith.cmpi ne, %1, %c0_i32_0 : i32
    scf.if %2 {
      %cst = arith.constant 0.000000e+00 : f32
      %15 = vector.broadcast %cst : f32 to vector<8x512xf32>
      %c0_12 = arith.constant 0 : index
      %c0_13 = arith.constant 0 : index
      %16 = vector.load %arg5[%c0_12, %c0_13] : memref<8x512xf32, #tpu.memory_space<vmem>>, vector<8x512xf32>
      tpu.vector_store %arg5[%c0_12, %c0_13], %15 {strides = array<i32>} : memref<8x512xf32, #tpu.memory_space<vmem>>, vector<8x512xf32>,
    } else {
    }
    %c0 = arith.constant 0 : index
    %c0_1 = arith.constant 0 : index
    %3 = vector.load %arg1[%c0, %c0_1] : memref<8x512xf32, #tpu.memory_space<vmem>>, vector<8x512xf32>
    %c0_2 = arith.constant 0 : index
    %c0_3 = arith.constant 0 : index
    %4 = vector.load %arg2[%c0_2, %c0_3] : memref<8x512xf32, #tpu.memory_space<vmem>>, vector<8x512xf32>
    %5 = arith.subf %3, %4 : vector<8x512xf32>
    %c0_4 = arith.constant 0 : index
    %c0_5 = arith.constant 0 : index
    %6 = vector.load %arg5[%c0_4, %c0_5] : memref<8x512xf32, #tpu.memory_space<vmem>>, vector<8x512xf32>
    %7 = arith.mulf %5, %5 : vector<8x512xf32>
    %c0_6 = arith.constant 0 : index
    %c0_7 = arith.constant 0 : index
    %8 = vector.load %arg3[%c0_6, %c0_7] : memref<8x512xf32, #tpu.memory_space<vmem>>, vector<8x512xf32>
    %9 = arith.mulf %7, %8 : vector<8x512xf32>
    %10 = arith.addf %6, %9 : vector<8x512xf32>
    %c0_8 = arith.constant 0 : index
    %c0_9 = arith.constant 0 : index
    %11 = vector.load %arg5[%c0_8, %c0_9] : memref<8x512xf32, #tpu.memory_space<vmem>>, vector<8x512xf32>
    tpu.vector_store %arg5[%c0_8, %c0_9], %10 {strides = array<i32>} : memref<8x512xf32, #tpu.memory_space<vmem>>, vector<8x512xf32>,
    %c0_i32_10 = arith.constant 0 : i32
    %12 = arith.cmpi eq, %arg0, %c0_i32_10 : i32
    %13 = arith.extui %12 : i1 to i32
    %c0_i32_11 = arith.constant 0 : i32
    %14 = arith.cmpi ne, %13, %c0_i32_11 : i32
    scf.if %14 {
      %c0_12 = arith.constant 0 : index
      %c0_13 = arith.constant 0 : index
      %15 = vector.load %arg5[%c0_12, %c0_13] : memref<8x512xf32, #tpu.memory_space<vmem>>, vector<8x512xf32>
      %16 = vector.shape_cast %15 : vector<8x512xf32> to vector<1x8x512xf32>
      %cst = arith.constant dense<0.000000e+00> : vector<1xf32>
      %17 = vector.multi_reduction <add>, %16, %cst [1, 2] : vector<1x8x512xf32> to vector<1xf32>
      %18 = vector.shape_cast %17 : vector<1xf32> to vector<1x1x1xf32>
      %19 = vector.extract %18[0, 0, 0] : f32 from vector<1x1x1xf32>
      %cst_14 = arith.constant 5.000000e-01 : f32
      %20 = arith.mulf %19, %cst_14 : f32
      %c0_15 = arith.constant 0 : index
      %c0_16 = arith.constant 0 : index
      %21 = memref.load %arg4[%c0_15, %c0_16] : memref<1x1xf32, #tpu.memory_space<smem>>
      memref.store %20, %arg4[%c0_15, %c0_16] : memref<1x1xf32, #tpu.memory_space<smem>>
    } else {
    }
    return
  }
  func.func @transform_0(%arg0: i32) -> (i32, i32) {
    %c0_i32 = arith.constant 0 : i32
    %c0_i32_0 = arith.constant 0 : i32
    return %arg0, %c0_i32 : i32, i32
  }
  func.func @transform_1(%arg0: i32) -> (i32, i32) {
    %c0_i32 = arith.constant 0 : i32
    %c0_i32_0 = arith.constant 0 : i32
    return %arg0, %c0_i32 : i32, i32
  }
  func.func @transform_2(%arg0: i32) -> (i32, i32) {
    %c0_i32 = arith.constant 0 : i32
    %c0_i32_0 = arith.constant 0 : i32
    return %arg0, %c0_i32 : i32, i32
  }
  func.func @transform_3(%arg0: i32) -> (i32, i32) {
    %c0_i32 = arith.constant 0 : i32
    %c0_i32_0 = arith.constant 0 : i32
    %c0_i32_1 = arith.constant 0 : i32
    return %c0_i32, %c0_i32_0 : i32, i32
  }
}

</mosaic_0001>

<llo_original>
// kernel: tpu_custom_call.1
$region0: #{tpu_custom_call.1}
  #allocation0 [shape = 'u32[]', space=smem, size = 0x4, offset = 0x4, fixed_abs, tag = 'smem constant byte address 0x4 - core index']
  #allocation1 [shape = 'u32[72,128]{1,0:T(1,128)}', space=vmem, size = 0x9000, scoped, tag = 'internal scratch']
  #allocation2 [shape = 'f32[8,512]{1,0:T(8,128)}', space=vmem, size = 0x4000, scoped, tag = 'scratch operand']
  %s0 = inlined_call_operand.hbm [shape: f32[8,512], index: 0, kind: input, shape index: {}]
  %s1 = inlined_call_operand.hbm [shape: f32[8,512], index: 1, kind: input, shape index: {}]
  %s2 = inlined_call_operand.hbm [shape: f32[8,512], index: 2, kind: input, shape index: {}]
  %s3 = inlined_call_operand.hbm [shape: f32[1,1], index: 3, kind: output, shape index: {}]
  %s4 = sld [smem:[#allocation0]]
  $region42: #{tpu_custom_call.1} parent=0
    _
  %s6 = ssub.s32 1, %s4
  %s7 = scalar_select 0, %s6, %s4
  $region1: #{tpu_custom_call.1} parent=0
    #allocation3 [shape = 'u8[16384]{0}', space=vmem, size = 0x4000, scoped, tag = 'input window, operand 0, single buffered']
    #allocation4 [shape = 's32[1]{0}', space=sflag, size = 0x4, scoped, tag = 'scoped memory for tpu_custom_call.1']
    #allocation5 [shape = 's32[1]{0}', space=sflag, size = 0x4, scoped, tag = 'scoped memory for tpu_custom_call.1']
    #allocation6 [shape = 'u8[16384]{0}', space=vmem, size = 0x4000, scoped, tag = 'input window, operand 1, single buffered']
    #allocation7 [shape = 's32[1]{0}', space=sflag, size = 0x4, scoped, tag = 'scoped memory for tpu_custom_call.1']
    #allocation8 [shape = 'u8[16384]{0}', space=vmem, size = 0x4000, scoped, tag = 'input window, operand 2, single buffered']
    #allocation9 [shape = 'u8[512]{0}', space=smem, size = 0x200, scoped, tag = 'output window, operand 0, single buffered']
    %8 = vsyncpa [#allocation4], 0
    %9 = vsyncpa [#allocation7], 0
    %10 = vsyncpa [#allocation5], 0
    // Predicated region
    $region2: #{tpu_custom_call.1} parent=1 // pred_check
      _
    $region3: #{tpu_custom_call.1} parent=1 // pred_check_branch
      %12 = sbr.rel (0) target = $region5
    $region4: #{tpu_custom_call.1} parent=1 // pred_region
      %14 = vsyncadd [#allocation4], 0
      %s16 = sshll.u32 %s0, 4
      %s17 = int_to_ptr.hbm [resolvable:$true] %s16
      %s18 = sshll.u32 [#allocation3], 4
      %s19 = int_to_ptr.vmem [resolvable:$true] %s18
      %21 = dma.hbm_to_vmem [thread:$0]  %s17, 512, %s19, [#allocation4]
    $region5: #{tpu_custom_call.1} parent=1 // pred_fallthru
      _
    // Predicated region
    $region6: #{tpu_custom_call.1} parent=1 // pred_check
      _
    $region7: #{tpu_custom_call.1} parent=1 // pred_check_branch
      %23 = sbr.rel (0) target = $region9
    $region8: #{tpu_custom_call.1} parent=1 // pred_region
      %25 = vsyncadd [#allocation7], 0
      %s27 = sshll.u32 %s1, 4
      %s28 = int_to_ptr.hbm [resolvable:$true] %s27
      %s29 = sshll.u32 [#allocation6], 4
      %s30 = int_to_ptr.vmem [resolvable:$true] %s29
      %32 = dma.hbm_to_vmem [thread:$0]  %s28, 512, %s30, [#allocation7]
    $region9: #{tpu_custom_call.1} parent=1 // pred_fallthru
      _
    // Predicated region
    $region10: #{tpu_custom_call.1} parent=1 // pred_check
      _
    $region11: #{tpu_custom_call.1} parent=1 // pred_check_branch
      %34 = sbr.rel (0) target = $region13
    $region12: #{tpu_custom_call.1} parent=1 // pred_region
      %36 = vsyncadd [#allocation7], 0
      %s38 = sshll.u32 %s2, 4
      %s39 = int_to_ptr.hbm [resolvable:$true] %s38
      %s40 = sshll.u32 [#allocation8], 4
      %s41 = int_to_ptr.vmem [resolvable:$true] %s40
      %43 = dma.hbm_to_vmem [thread:$0]  %s39, 512, %s41, [#allocation7]
    $region13: #{tpu_custom_call.1} parent=1 // pred_fallthru
      _
    // Predicated region
    $region14: #{tpu_custom_call.1} parent=1 // pred_check
      _
    $region15: #{tpu_custom_call.1} parent=1 // pred_check_branch
      %45 = sbr.rel (0) target = $region17
    $region16: #{tpu_custom_call.1} parent=1 // pred_region
      %47 = dma.done [#allocation4], 512
    $region17: #{tpu_custom_call.1} parent=1 // pred_fallthru
      _
    // Predicated region
    $region18: #{tpu_custom_call.1} parent=1 // pred_check
      _
    $region19: #{tpu_custom_call.1} parent=1 // pred_check_branch
      %49 = sbr.rel (0) target = $region21
    $region20: #{tpu_custom_call.1} parent=1 // pred_region
      %51 = dma.done [#allocation7], 512
    $region21: #{tpu_custom_call.1} parent=1 // pred_fallthru
      _
    // Predicated region
    $region22: #{tpu_custom_call.1} parent=1 // pred_check
      _
    $region23: #{tpu_custom_call.1} parent=1 // pred_check_branch
      %53 = sbr.rel (0) target = $region25
    $region24: #{tpu_custom_call.1} parent=1 // pred_region
      %55 = dma.done [#allocation7], 512
    $region25: #{tpu_custom_call.1} parent=1 // pred_fallthru
      _
    %p56 = scmp.eq.s32.totalorder 0, 0
    // Predicated region
    $region26: #{tpu_custom_call.1} parent=1 // pred_check
      %p57 = pneg %p56
    $region27: #{tpu_custom_call.1} parent=1 // pred_check_branch
      %59 = sbr.rel (%p57) target = $region29
    $region28: #{tpu_custom_call.1} parent=1 // pred_region
      %60 = vst [vmem:[#allocation2] sm:$0xff] 0.0
      %61 = vst [vmem:[#allocation2 + $0x8] sm:$0xff] 0.0
      %62 = vst [vmem:[#allocation2 + $0x10] sm:$0xff] 0.0
      %63 = vst [vmem:[#allocation2 + $0x18] sm:$0xff] 0.0
    $region29: #{tpu_custom_call.1} parent=1 // pred_fallthru
      _
    %v64 = vld [vmem:[#allocation3] sm:$0xff]
    %v65 = vld [vmem:[#allocation3 + $0x8] sm:$0xff]
    %v66 = vld [vmem:[#allocation3 + $0x10] sm:$0xff]
    %v67 = vld [vmem:[#allocation3 + $0x18] sm:$0xff]
    %v68 = vld [vmem:[#allocation6] sm:$0xff]
    %v69 = vld [vmem:[#allocation6 + $0x8] sm:$0xff]
    %v70 = vld [vmem:[#allocation6 + $0x10] sm:$0xff]
    %v71 = vld [vmem:[#allocation6 + $0x18] sm:$0xff]
    %v72 = vsub.f32 %v64, %v68
    %v73 = vsub.f32 %v65, %v69
    %v74 = vsub.f32 %v66, %v70
    %v75 = vsub.f32 %v67, %v71
    %v76 = vld [vmem:[#allocation2] sm:$0xff]
    %v77 = vld [vmem:[#allocation2 + $0x8] sm:$0xff]
    %v78 = vld [vmem:[#allocation2 + $0x10] sm:$0xff]
    %v79 = vld [vmem:[#allocation2 + $0x18] sm:$0xff]
    %v80 = vmul.f32 %v72, %v72
    %v81 = vmul.f32 %v73, %v73
    %v82 = vmul.f32 %v74, %v74
    %v83 = vmul.f32 %v75, %v75
    %v84 = vld [vmem:[#allocation8] sm:$0xff]
    %v85 = vld [vmem:[#allocation8 + $0x8] sm:$0xff]
    %v86 = vld [vmem:[#allocation8 + $0x10] sm:$0xff]
    %v87 = vld [vmem:[#allocation8 + $0x18] sm:$0xff]
    %v88 = vmul.f32 %v80, %v84
    %v89 = vmul.f32 %v81, %v85
    %v90 = vmul.f32 %v82, %v86
    %v91 = vmul.f32 %v83, %v87
    %v92 = vadd.f32 %v76, %v88
    %v93 = vadd.f32 %v77, %v89
    %v94 = vadd.f32 %v78, %v90
    %v95 = vadd.f32 %v79, %v91
    %96 = vst [vmem:[#allocation2] sm:$0xff] %v92
    %97 = vst [vmem:[#allocation2 + $0x8] sm:$0xff] %v93
    %98 = vst [vmem:[#allocation2 + $0x10] sm:$0xff] %v94
    %99 = vst [vmem:[#allocation2 + $0x18] sm:$0xff] %v95
    // Predicated region
    $region30: #{tpu_custom_call.1} parent=1 // pred_check
      %p100 = pneg %p56
    $region31: #{tpu_custom_call.1} parent=1 // pred_check_branch
      %102 = sbr.rel (%p100) target = $region33
    $region32: #{tpu_custom_call.1} parent=1 // pred_region
      %v103 = vld [vmem:[#allocation2] sm:$0xff]
      %v104 = vld [vmem:[#allocation2 + $0x8] sm:$0xff]
      %v105 = vld [vmem:[#allocation2 + $0x10] sm:$0xff]
      %v106 = vld [vmem:[#allocation2 + $0x18] sm:$0xff]
      %v107 = vadd.f32 %v103, %v104
      %v108 = vadd.f32 %v107, %v105
      %v109 = vadd.f32 %v108, %v106
      %110 = vadd.xlane.f32.xlu0 %v109
      %v111 = vpop.xlane.xlu0 %110
      %v112 = vrot.slane %v111, 4
      %v113 = vadd.f32 %v111, %v112
      %v114 = vrot.slane %v113, 2
      %v115 = vadd.f32 %v113, %v114
      %v116 = vrot.slane %v115, 1
      %v117 = vadd.f32 %v115, %v116
      %s118 = vtos %v117
      %s119 = smul.f32 %s118, 0.5
      %s120 = scalar_lea.smem [#allocation9], 0
      %121 = sst [smem:[%s120]] %s119
    $region33: #{tpu_custom_call.1} parent=1 // pred_fallthru
      _
    // Predicated region
    $region34: #{tpu_custom_call.1} parent=1 // pred_check
      _
    $region35: #{tpu_custom_call.1} parent=1 // pred_check_branch
      %123 = sbr.rel (0) target = $region37
    $region36: #{tpu_custom_call.1} parent=1 // pred_region
      %125 = vsyncadd [#allocation5], 0
      %s127 = sshll.u32 %s3, 4
      %s128 = int_to_ptr.hbm [resolvable:$true] %s127
      %130 = dma.smem_to_hbm [#allocation9], 16, %s128, [#allocation5]
    $region37: #{tpu_custom_call.1} parent=1 // pred_fallthru
      _
    // Predicated region
    $region38: #{tpu_custom_call.1} parent=1 // pred_check
      _
    $region39: #{tpu_custom_call.1} parent=1 // pred_check_branch
      %132 = sbr.rel (0) target = $region41
    $region40: #{tpu_custom_call.1} parent=1 // pred_region
      %134 = dma.done [#allocation5], 16
    $region41: #{tpu_custom_call.1} parent=1 // pred_fallthru
      _
    %135 = sfence
    %136 = vsyncpa [#allocation4], 1
    %137 = vsyncpa [#allocation7], 1
    %138 = vsyncpa [#allocation5], 1

</llo_original>
